<compile_context>
chip_gen: v6e
topology: v6e:2x2x1
jax: 0.10.0
libtpu: 0.0.40
codegen_flags: <defaults>
</compile_context>

<pallas_src>
import functools

import jax
import jax.numpy as jnp
from jax.experimental import pallas as pl
from jax.experimental.pallas import tpu as pltpu


# ---------------------------------------------------------------------------
# Kernel
# ---------------------------------------------------------------------------

def _hrp_partial_kernel(o11_ref, o12_ref, o21_ref, o22_ref, t1_ref, t2_ref,
                        out_ref, acc_ref):
    """Grid = (batch, hw_split, hw_tile).  Per-step blocks:

      o11_ref, o21_ref, t1_ref : (1, K, tile)
      o12_ref, o22_ref, t2_ref : (1, 2, K, tile)   x half = [0,0], y half = [0,1]
      out_ref                  : (1, 1, K, 8)      (written on last tile only)
      acc_ref (VMEM scratch)   : (K, 8) f32        (6 sums + 2 zero pad lanes)
    """
    s = pl.program_id(2)

    @pl.when(s == 0)
    def _init():
        acc_ref[...] = jnp.zeros_like(acc_ref)

    f32 = jnp.float32
    t1 = t1_ref[0].astype(f32)            # (K, tile)
    t2x = t2_ref[0, 0].astype(f32)
    t2y = t2_ref[0, 1].astype(f32)

    # loss1_1: out1_1 - targets1
    d11 = o11_ref[0].astype(f32) - t1
    # loss1_2: out1_2_{x,y} * targets1 - targets2_{x,y}
    dx = o12_ref[0, 0].astype(f32) * t1 - t2x
    dy = o12_ref[0, 1].astype(f32) * t1 - t2y
    # loss2_1: out2_1 - targets1
    d21 = o21_ref[0].astype(f32) - t1
    # loss2_2: (out2_2_{x,y} - targets2_{x,y}) * targets1
    # (the 0/1 top-k mask is applied outside the kernel; mask^2 == mask)
    ex = (o22_ref[0, 0].astype(f32) - t2x) * t1
    ey = (o22_ref[0, 1].astype(f32) - t2y) * t1

    def ssq(v):  # spatial sum of squares over this tile -> (K, 1)
        return jnp.sum(v * v, axis=-1, keepdims=True)

    # Place the six column sums into one (K, 8) block and do a single
    # accumulator read-modify-write (no lane-width-1 masked stores).
    lane = jax.lax.broadcasted_iota(jnp.int32, acc_ref.shape, 1)   # (K, 8)
    step_sums = (jnp.where(lane == 0, ssq(d11), 0.0) +
                 jnp.where(lane == 1, ssq(dx), 0.0) +
                 jnp.where(lane == 2, ssq(dy), 0.0) +
                 jnp.where(lane == 3, ssq(d21), 0.0) +
                 jnp.where(lane == 4, ssq(ex), 0.0) +
                 jnp.where(lane == 5, ssq(ey), 0.0))
    acc_ref[...] += step_sums

    @pl.when(s == pl.num_programs(2) - 1)
    def _finalize():
        out_ref[0, 0] = acc_ref[...]


# ---------------------------------------------------------------------------
# Tiling / budget helpers
# ---------------------------------------------------------------------------

def _vmem_budget_bytes():
    """Generation-aware total scoped-VMEM budget for this kernel."""
    try:
        cap = int(pltpu.get_tpu_info().vmem_capacity_bytes)
    except Exception:
        cap = 64 * 1024 * 1024          # conservative fallback (v7x-sized)
    # 3/8 of physical VMEM, capped: ~48 MiB on v5e/v6e (128 MiB physical),
    # ~24 MiB on v7x (64 MiB physical) -> plenty of headroom for internal
    # scratch while far above the default scoped limit.
    return min(cap * 3 // 8, 48 * 1024 * 1024)


def _choose_hw_tile(hw_pad, num_kpt, itemsize, input_budget_bytes):
    """Largest lane-aligned spatial tile that divides the (padded) HW extent
    while keeping the 6 double-buffered input blocks (9 K-rows of data per
    lane) under the generation-aware budget.  K is rounded up to the sublane
    tile (8 for f32, 16 for bf16) to account for VMEM padding."""
    sublane = 8 * max(1, 4 // max(1, itemsize))      # 8 (f32) / 16 (bf16)
    k_pad = -(-num_kpt // sublane) * sublane
    bytes_per_lane = 2 * 9 * k_pad * itemsize        # 2x double buffering
    cap = input_budget_bytes // bytes_per_lane
    cap = max(128, min(16 * 1024, (cap // 128) * 128))

    best = 128
    t = 128
    limit = min(hw_pad, cap)
    while t <= limit:
        if hw_pad % t == 0:
            best = t
        t += 128
    return best


# ---------------------------------------------------------------------------
# Pallas wrapper producing per-(b, k) spatial sums
# ---------------------------------------------------------------------------

def _partial_sums(out1_1, out1_2, out2_1, out2_2, targets1, targets2,
                  *, hw_tile=None, hw_split=None):
    """Returns a (B, hw_split, K, 8) f32 slab of per-(b,k) spatial sums:
       col 0: sum (o11 - t1)^2
       col 1: sum (o12_x * t1 - t2_x)^2      col 2: same for y
       col 3: sum (o21 - t1)^2
       col 4: sum ((o22_x - t2_x) * t1)^2    col 5: same for y
       cols 6,7: zero padding."""
    B, K, H, W = out1_1.shape
    HW = H * W

    o11 = out1_1.reshape(B, K, HW)
    o21 = out2_1.reshape(B, K, HW)
    t1 = targets1.reshape(B, K, HW)
    # Free reshape: x/y halves become index 0/1 of a leading "2" axis; both are
    # fetched in one (1, 2, K, tile) block and sliced statically in-kernel.
    o12 = out1_2.reshape(B, 2, K, HW)
    o22 = out2_2.reshape(B, 2, K, HW)
    t2 = targets2.reshape(B, 2, K, HW)

    # Zero-pad the flattened spatial axis up to a lane-aligned multiple.  This
    # is exact: every term is a product/difference of zero-padded data, so the
    # padded tail contributes 0 to each sum.
    if hw_tile is not None:
        assert hw_tile % 128 == 0, "hw_tile must be a multiple of 128"
        pad_mult = hw_tile
    else:
        pad_mult = 128
    hw_pad = -(-HW // pad_mult) * pad_mult
    if hw_pad != HW:
        pad = hw_pad - HW
        p3 = ((0, 0), (0, 0), (0, pad))
        p4 = ((0, 0), (0, 0), (0, 0), (0, pad))
        o11 = jnp.pad(o11, p3)
        o21 = jnp.pad(o21, p3)
        t1 = jnp.pad(t1, p3)
        o12 = jnp.pad(o12, p4)
        o22 = jnp.pad(o22, p4)
        t2 = jnp.pad(t2, p4)

    itemsize = jnp.dtype(out1_1.dtype).itemsize
    vmem_budget = _vmem_budget_bytes()
    input_budget = (vmem_budget * 3) // 4            # headroom for scratch/out

    tile = hw_tile if hw_tile is not None else _choose_hw_tile(
        hw_pad, K, itemsize, input_budget)
    assert hw_pad % tile == 0, (hw_pad, tile)
    n_s_total = hw_pad // tile

    # v7x has 2 TensorCores per chip; if the batch cannot fill them, split the
    # spatial reduction into a second "parallel" axis of partial sums (summed
    # in plain JAX afterwards).  Neutral on single-core v5e/v6e.
    if hw_split is None:
        hw_split = 2 if (B < 2 and n_s_total >= 2 and n_s_total % 2 == 0) else 1
    assert n_s_total % hw_split == 0, (n_s_total, hw_split)
    n_s = n_s_total // hw_split

    spec3 = pl.BlockSpec((1, K, tile), lambda b, p, s: (b, 0, p * n_s + s))
    spec_xy = pl.BlockSpec((1, 2, K, tile),
                           lambda b, p, s: (b, 0, 0, p * n_s + s))
    out_spec = pl.BlockSpec((1, 1, K, 8), lambda b, p, s: (b, p, 0, 0))

    sums = pl.pallas_call(
        _hrp_partial_kernel,
        out_shape=jax.ShapeDtypeStruct((B, hw_split, K, 8), jnp.float32),
        grid_spec=pltpu.PrefetchScalarGridSpec(
            num_scalar_prefetch=0,
            grid=(B, hw_split, n_s),
            in_specs=[spec3, spec_xy,        # out1_1, out1_2 (x+y fused)
                      spec3, spec_xy,        # out2_1, out2_2 (x+y fused)
                      spec3, spec_xy],       # targets1, targets2 (x+y fused)
            out_specs=out_spec,
            scratch_shapes=[pltpu.VMEM((K, 8), jnp.float32)],
        ),
        compiler_params=pltpu.CompilerParams(
            dimension_semantics=("parallel", "parallel", "arbitrary"),
            vmem_limit_bytes=int(vmem_budget)),
    )(o11, o12, o21, o22, t1, t2)

    return sums


# ---------------------------------------------------------------------------
# Full HRP loss (kernel sums + tiny plain-JAX glue)
# ---------------------------------------------------------------------------

def hrp_loss(out1_1, out1_2, out2_1, out2_2, targets1, targets2, weights,
             *, num_kpt, hw_tile=None, hw_split=None):
    """Pallas implementation of HRPLoss.forward."""
    B, K, H, W = out1_1.shape
    assert K == num_kpt
    n_elems = B * K * H * W

    sums = _partial_sums(out1_1, out1_2, out2_1, out2_2, targets1, targets2,
                         hw_tile=hw_tile, hw_split=hw_split)
    sums = jnp.sum(sums, axis=1)          # merge hw_split partials -> (B, K, 8)
    s11 = sums[:, :, 0]
    s12x = sums[:, :, 1]
    s12y = sums[:, :, 2]
    s21 = sums[:, :, 3]
    s22x = sums[:, :, 4]
    s22y = sums[:, :, 5]

    # nn.MSELoss (mean over all B*K*H*W elements)
    loss1_1 = jnp.sum(s11) / n_elems
    loss1_2 = (jnp.sum(s12x) + jnp.sum(s12y)) / n_elems

    # MSELoss(reduction='none'): diff^2 / 2 / B, summed over H, W -> (B, K)
    loss2_1_bk = s21 / 2.0 / B

    # top-k over keypoints and 0/1 mask scatter (tiny, plain JAX).
    # TODO(synk): jax.lax.top_k tie-breaking may differ from torch.topk on exact ties.
    k_top = num_kpt // 2
    _, idx = jax.lax.top_k(loss2_1_bk, k_top)
    mask = jnp.zeros((B, K), jnp.float32).at[
        jnp.arange(B)[:, None], idx].set(1.0)

    loss2_1 = jnp.mean(loss2_1_bk * mask)

    # Masked offset loss; mask is 0/1 so mask^2 == mask.
    loss2_2 = (jnp.sum(s22x * mask) + jnp.sum(s22y * mask)) / n_elems

    loss = (loss1_1 + loss2_1) * weights[0] + \
           (loss1_2 + loss2_2 * 5.0) * weights[1]
    return loss


def hrp_loss_reference(out1_1, out1_2, out2_1, out2_2, targets1, targets2,
                       weights, *, num_kpt):
    """Pure-jnp mirror of the PyTorch forward, for correctness checking."""
    B = out1_1.shape[0]
    K = num_kpt

    def mse_mean(a, b):
        return jnp.mean((a - b) ** 2)

    loss1_1 = mse_mean(out1_1, targets1)
    pre_x = out1_2[:, :K] * targets1
    pre_y = out1_2[:, K:] * targets1
    lab_x = targets2[:, :K]
    lab_y = targets2[:, K:]
    loss1_2 = mse_mean(pre_x, lab_x) + mse_mean(pre_y, lab_y)

    l21 = ((out2_1 - targets1) ** 2) / 2.0 / B
    l21 = l21.sum(axis=2).sum(axis=2)              # (B, K)
    _, idx = jax.lax.top_k(l21, K // 2)
    mask = jnp.zeros((B, K), jnp.float32).at[
        jnp.arange(B)[:, None], idx].set(1.0)
    loss2_1 = jnp.mean(l21 * mask)

    m4 = mask[:, :, None, None]
    pre_x = out2_2[:, :K] * (targets1 * m4)
    pre_y = out2_2[:, K:] * (targets1 * m4)
    lab_x = targets2[:, :K] * (targets1 * m4)
    lab_y = targets2[:, K:] * (targets1 * m4)
    loss2_2 = mse_mean(pre_x, lab_x) + mse_mean(pre_y, lab_y)

    return (loss1_1 + loss2_1) * weights[0] + \
           (loss1_2 + loss2_2 * 5.0) * weights[1]


if __name__ == "__main__":
    num_kpt = 8
    B, H, W = 2, 16, 16

    key = jax.random.PRNGKey(0)
    ks = jax.random.split(key, 7)
    out1_1 = jax.random.normal(ks[0], (B, num_kpt, H, W), jnp.float32)
    out1_2 = jax.random.normal(ks[1], (B, 2 * num_kpt, H, W), jnp.float32)
    out2_1 = jax.random.normal(ks[2], (B, num_kpt, H, W), jnp.float32)
    out2_2 = jax.random.normal(ks[3], (B, 2 * num_kpt, H, W), jnp.float32)
    targets1 = jax.random.uniform(ks[4], (B, num_kpt, H, W), jnp.float32)
    targets2 = jax.random.normal(ks[5], (B, 2 * num_kpt, H, W), jnp.float32)
    weights = jnp.array([1.0, 0.5], jnp.float32)

    ref = jax.block_until_ready(
        hrp_loss_reference(out1_1, out1_2, out2_1, out2_2, targets1, targets2,
                           weights, num_kpt=num_kpt))

    # 1) Multi-tile spatial grid (HW=256 -> two 128-lane tiles): exercises the
    #    pl.when init/accumulate/finalize path.
    loss_tiled = jax.block_until_ready(
        jax.jit(functools.partial(hrp_loss, num_kpt=num_kpt, hw_tile=128))(
            out1_1, out1_2, out2_1, out2_2, targets1, targets2, weights))
    assert jnp.allclose(loss_tiled, ref, rtol=1e-5, atol=1e-5), (loss_tiled, ref)

    # 2) Auto (budget-derived) tile: production path.
    loss_auto = jax.block_until_ready(
        jax.jit(functools.partial(hrp_loss, num_kpt=num_kpt))(
            out1_1, out1_2, out2_1, out2_2, targets1, targets2, weights))
    assert jnp.allclose(loss_auto, ref, rtol=1e-5, atol=1e-5), (loss_auto, ref)

    # 3) B=1 with hw_split=2 (the v7x dual-TensorCore path): partial sums over
    #    two parallel spatial halves, merged in plain JAX.
    args1 = (out1_1[:1], out1_2[:1], out2_1[:1], out2_2[:1],
             targets1[:1], targets2[:1])
    ref_b1 = jax.block_until_ready(
        hrp_loss_reference(*args1, weights, num_kpt=num_kpt))
    loss_b1 = jax.block_until_ready(
        jax.jit(functools.partial(hrp_loss, num_kpt=num_kpt, hw_tile=128))(
            *args1, weights))
    assert jnp.allclose(loss_b1, ref_b1, rtol=1e-5, atol=1e-5), (loss_b1, ref_b1)

    # 4) HW not a multiple of 128 (10x10 -> 100): exercises zero-padding path.
    kp = jax.random.split(jax.random.PRNGKey(1), 6)
    p11 = jax.random.normal(kp[0], (B, num_kpt, 10, 10), jnp.float32)
    p12 = jax.random.normal(kp[1], (B, 2 * num_kpt, 10, 10), jnp.float32)
    p21 = jax.random.normal(kp[2], (B, num_kpt, 10, 10), jnp.float32)
    p22 = jax.random.normal(kp[3], (B, 2 * num_kpt, 10, 10), jnp.float32)
    pt1 = jax.random.uniform(kp[4], (B, num_kpt, 10, 10), jnp.float32)
    pt2 = jax.random.normal(kp[5], (B, 2 * num_kpt, 10, 10), jnp.float32)
    ref_pad = jax.block_until_ready(
        hrp_loss_reference(p11, p12, p21, p22, pt1, pt2, weights,
                           num_kpt=num_kpt))
    loss_pad = jax.block_until_ready(
        jax.jit(functools.partial(hrp_loss, num_kpt=num_kpt))(
            p11, p12, p21, p22, pt1, pt2, weights))
    assert jnp.allclose(loss_pad, ref_pad, rtol=1e-5, atol=1e-5), (loss_pad, ref_pad)

    # 5) bf16 inputs (bandwidth optimization); kernel accumulates in f32, so
    #    compare against the reference evaluated on the bf16-rounded values
    #    with a slightly looser tolerance.
    bf = jnp.bfloat16
    args_bf = tuple(a.astype(bf) for a in
                    (out1_1, out1_2, out2_1, out2_2, targets1, targets2))
    ref_bf = jax.block_until_ready(
        hrp_loss_reference(*(a.astype(jnp.float32) for a in args_bf),
                           weights, num_kpt=num_kpt))
    loss_bf = jax.block_until_ready(
        jax.jit(functools.partial(hrp_loss, num_kpt=num_kpt))(
            *args_bf, weights))
    assert jnp.allclose(loss_bf, ref_bf, rtol=1e-3, atol=1e-3), (loss_bf, ref_bf)

    print("KERNEL_OK")
</pallas_src>

<mosaic_0001>
module attributes {stable_mosaic.version = 11 : i64} {
  func.func @_hrp_partial_kernel(%arg0: i32, %arg1: i32, %arg2: i32, %arg3: memref<1x8x128xf32, #tpu.memory_space<vmem>>, %arg4: memref<1x2x8x128xf32, #tpu.memory_space<vmem>>, %arg5: memref<1x8x128xf32, #tpu.memory_space<vmem>>, %arg6: memref<1x2x8x128xf32, #tpu.memory_space<vmem>>, %arg7: memref<1x8x128xf32, #tpu.memory_space<vmem>>, %arg8: memref<1x2x8x128xf32, #tpu.memory_space<vmem>>, %arg9: memref<1x1x8x8xf32, #tpu.memory_space<vmem>>, %arg10: memref<8x8xf32, #tpu.memory_space<vmem>>) attributes {dimension_semantics = [#tpu.dimension_semantics<parallel>, #tpu.dimension_semantics<parallel>, #tpu.dimension_semantics<arbitrary>], iteration_bounds = array<i64: 2, 1, 2>, scalar_prefetch = 0 : i64, scratch_operands = 1 : i64, tpu.core_type = #tpu.core_type<tc>, window_params = [{transform_indices = @transform_0, window_bounds = array<i64: 1, 8, 128>}, {transform_indices = @transform_1, window_bounds = array<i64: 1, 2, 8, 128>}, {transform_indices = @transform_2, window_bounds = array<i64: 1, 8, 128>}, {transform_indices = @transform_3, window_bounds = array<i64: 1, 2, 8, 128>}, {transform_indices = @transform_4, window_bounds = array<i64: 1, 8, 128>}, {transform_indices = @transform_5, window_bounds = array<i64: 1, 2, 8, 128>}, {transform_indices = @transform_6, window_bounds = array<i64: 1, 1, 8, 8>}]} {
    %c0_i32 = arith.constant 0 : i32
    %0 = arith.cmpi eq, %arg2, %c0_i32 : i32
    %1 = arith.extui %0 : i1 to i32
    %c0_i32_0 = arith.constant 0 : i32
    %2 = arith.cmpi ne, %1, %c0_i32_0 : i32
    scf.if %2 {
      %cst_50 = arith.constant 0.000000e+00 : f32
      %97 = vector.broadcast %cst_50 : f32 to vector<8x8xf32>
      %c0_51 = arith.constant 0 : index
      %c0_52 = arith.constant 0 : index
      %98 = vector.load %arg10[%c0_51, %c0_52] : memref<8x8xf32, #tpu.memory_space<vmem>>, vector<8x8xf32>
      tpu.vector_store %arg10[%c0_51, %c0_52], %97 {strides = array<i32>} : memref<8x8xf32, #tpu.memory_space<vmem>>, vector<8x8xf32>,
    } else {
    }
    %c0 = arith.constant 0 : index
    %c0_1 = arith.constant 0 : index
    %c0_2 = arith.constant 0 : index
    %3 = vector.load %arg7[%c0, %c0_1, %c0_2] : memref<1x8x128xf32, #tpu.memory_space<vmem>>, vector<1x8x128xf32>
    %4 = vector.shape_cast %3 : vector<1x8x128xf32> to vector<8x128xf32>
    %c0_3 = arith.constant 0 : index
    %c0_4 = arith.constant 0 : index
    %c0_5 = arith.constant 0 : index
    %c0_6 = arith.constant 0 : index
    %5 = vector.load %arg8[%c0_3, %c0_4, %c0_5, %c0_6] : memref<1x2x8x128xf32, #tpu.memory_space<vmem>>, vector<1x1x8x128xf32>
    %6 = vector.shape_cast %5 : vector<1x1x8x128xf32> to vector<8x128xf32>
    %c0_7 = arith.constant 0 : index
    %c1 = arith.constant 1 : index
    %c0_8 = arith.constant 0 : index
    %c0_9 = arith.constant 0 : index
    %7 = vector.load %arg8[%c0_7, %c1, %c0_8, %c0_9] : memref<1x2x8x128xf32, #tpu.memory_space<vmem>>, vector<1x1x8x128xf32>
    %8 = vector.shape_cast %7 : vector<1x1x8x128xf32> to vector<8x128xf32>
    %c0_10 = arith.constant 0 : index
    %c0_11 = arith.constant 0 : index
    %c0_12 = arith.constant 0 : index
    %9 = vector.load %arg3[%c0_10, %c0_11, %c0_12] : memref<1x8x128xf32, #tpu.memory_space<vmem>>, vector<1x8x128xf32>
    %10 = vector.shape_cast %9 : vector<1x8x128xf32> to vector<8x128xf32>
    %11 = arith.subf %10, %4 : vector<8x128xf32>
    %c0_13 = arith.constant 0 : index
    %c0_14 = arith.constant 0 : index
    %c0_15 = arith.constant 0 : index
    %c0_16 = arith.constant 0 : index
    %12 = vector.load %arg4[%c0_13, %c0_14, %c0_15, %c0_16] : memref<1x2x8x128xf32, #tpu.memory_space<vmem>>, vector<1x1x8x128xf32>
    %13 = vector.shape_cast %12 : vector<1x1x8x128xf32> to vector<8x128xf32>
    %14 = arith.mulf %13, %4 : vector<8x128xf32>
    %15 = arith.subf %14, %6 : vector<8x128xf32>
    %c0_17 = arith.constant 0 : index
    %c1_18 = arith.constant 1 : index
    %c0_19 = arith.constant 0 : index
    %c0_20 = arith.constant 0 : index
    %16 = vector.load %arg4[%c0_17, %c1_18, %c0_19, %c0_20] : memref<1x2x8x128xf32, #tpu.memory_space<vmem>>, vector<1x1x8x128xf32>
    %17 = vector.shape_cast %16 : vector<1x1x8x128xf32> to vector<8x128xf32>
    %18 = arith.mulf %17, %4 : vector<8x128xf32>
    %19 = arith.subf %18, %8 : vector<8x128xf32>
    %c0_21 = arith.constant 0 : index
    %c0_22 = arith.constant 0 : index
    %c0_23 = arith.constant 0 : index
    %20 = vector.load %arg5[%c0_21, %c0_22, %c0_23] : memref<1x8x128xf32, #tpu.memory_space<vmem>>, vector<1x8x128xf32>
    %21 = vector.shape_cast %20 : vector<1x8x128xf32> to vector<8x128xf32>
    %22 = arith.subf %21, %4 : vector<8x128xf32>
    %c0_24 = arith.constant 0 : index
    %c0_25 = arith.constant 0 : index
    %c0_26 = arith.constant 0 : index
    %c0_27 = arith.constant 0 : index
    %23 = vector.load %arg6[%c0_24, %c0_25, %c0_26, %c0_27] : memref<1x2x8x128xf32, #tpu.memory_space<vmem>>, vector<1x1x8x128xf32>
    %24 = vector.shape_cast %23 : vector<1x1x8x128xf32> to vector<8x128xf32>
    %25 = arith.subf %24, %6 : vector<8x128xf32>
    %26 = arith.mulf %25, %4 : vector<8x128xf32>
    %c0_28 = arith.constant 0 : index
    %c1_29 = arith.constant 1 : index
    %c0_30 = arith.constant 0 : index
    %c0_31 = arith.constant 0 : index
    %27 = vector.load %arg6[%c0_28, %c1_29, %c0_30, %c0_31] : memref<1x2x8x128xf32, #tpu.memory_space<vmem>>, vector<1x1x8x128xf32>
    %28 = vector.shape_cast %27 : vector<1x1x8x128xf32> to vector<8x128xf32>
    %29 = arith.subf %28, %8 : vector<8x128xf32>
    %30 = arith.mulf %29, %4 : vector<8x128xf32>
    %31 = tpu.iota {dimensions = array<i32: 1>} : vector<8x8xi32>
    %c0_i32_32 = arith.constant 0 : i32
    %32 = vector.broadcast %c0_i32_32 : i32 to vector<8x8xi32>
    %33 = arith.cmpi eq, %31, %32 : vector<8x8xi32>
    %34 = arith.mulf %11, %11 : vector<8x128xf32>
    %cst = arith.constant dense<0.000000e+00> : vector<8xf32>
    %35 = vector.multi_reduction <add>, %34, %cst [1] : vector<8x128xf32> to vector<8xf32>
    %36 = vector.shape_cast %35 : vector<8xf32> to vector<8x1xf32>
    %cst_33 = arith.constant 0.000000e+00 : f32
    %37 = vector.shape_cast %36 : vector<8x1xf32> to vector<8x1xf32>
    %38 = vector.broadcast %37 : vector<8x1xf32> to vector<8x8xf32>
    %39 = vector.broadcast %cst_33 : f32 to vector<8x8xf32>
    %40 = arith.select %33, %38, %39 : vector<8x8xi1>, vector<8x8xf32>
    %c1_i32 = arith.constant 1 : i32
    %41 = vector.broadcast %c1_i32 : i32 to vector<8x8xi32>
    %42 = arith.cmpi eq, %31, %41 : vector<8x8xi32>
    %43 = arith.mulf %15, %15 : vector<8x128xf32>
    %cst_34 = arith.constant dense<0.000000e+00> : vector<8xf32>
    %44 = vector.multi_reduction <add>, %43, %cst_34 [1] : vector<8x128xf32> to vector<8xf32>
    %45 = vector.shape_cast %44 : vector<8xf32> to vector<8x1xf32>
    %cst_35 = arith.constant 0.000000e+00 : f32
    %46 = vector.shape_cast %45 : vector<8x1xf32> to vector<8x1xf32>
    %47 = vector.broadcast %46 : vector<8x1xf32> to vector<8x8xf32>
    %48 = vector.broadcast %cst_35 : f32 to vector<8x8xf32>
    %49 = arith.select %42, %47, %48 : vector<8x8xi1>, vector<8x8xf32>
    %50 = arith.addf %40, %49 : vector<8x8xf32>
    %c2_i32 = arith.constant 2 : i32
    %51 = vector.broadcast %c2_i32 : i32 to vector<8x8xi32>
    %52 = arith.cmpi eq, %31, %51 : vector<8x8xi32>
    %53 = arith.mulf %19, %19 : vector<8x128xf32>
    %cst_36 = arith.constant dense<0.000000e+00> : vector<8xf32>
    %54 = vector.multi_reduction <add>, %53, %cst_36 [1] : vector<8x128xf32> to vector<8xf32>
    %55 = vector.shape_cast %54 : vector<8xf32> to vector<8x1xf32>
    %cst_37 = arith.constant 0.000000e+00 : f32
    %56 = vector.shape_cast %55 : vector<8x1xf32> to vector<8x1xf32>
    %57 = vector.broadcast %56 : vector<8x1xf32> to vector<8x8xf32>
    %58 = vector.broadcast %cst_37 : f32 to vector<8x8xf32>
    %59 = arith.select %52, %57, %58 : vector<8x8xi1>, vector<8x8xf32>
    %60 = arith.addf %50, %59 : vector<8x8xf32>
    %c3_i32 = arith.constant 3 : i32
    %61 = vector.broadcast %c3_i32 : i32 to vector<8x8xi32>
    %62 = arith.cmpi eq, %31, %61 : vector<8x8xi32>
    %63 = arith.mulf %22, %22 : vector<8x128xf32>
    %cst_38 = arith.constant dense<0.000000e+00> : vector<8xf32>
    %64 = vector.multi_reduction <add>, %63, %cst_38 [1] : vector<8x128xf32> to vector<8xf32>
    %65 = vector.shape_cast %64 : vector<8xf32> to vector<8x1xf32>
    %cst_39 = arith.constant 0.000000e+00 : f32
    %66 = vector.shape_cast %65 : vector<8x1xf32> to vector<8x1xf32>
    %67 = vector.broadcast %66 : vector<8x1xf32> to vector<8x8xf32>
    %68 = vector.broadcast %cst_39 : f32 to vector<8x8xf32>
    %69 = arith.select %62, %67, %68 : vector<8x8xi1>, vector<8x8xf32>
    %70 = arith.addf %60, %69 : vector<8x8xf32>
    %c4_i32 = arith.constant 4 : i32
    %71 = vector.broadcast %c4_i32 : i32 to vector<8x8xi32>
    %72 = arith.cmpi eq, %31, %71 : vector<8x8xi32>
    %73 = arith.mulf %26, %26 : vector<8x128xf32>
    %cst_40 = arith.constant dense<0.000000e+00> : vector<8xf32>
    %74 = vector.multi_reduction <add>, %73, %cst_40 [1] : vector<8x128xf32> to vector<8xf32>
    %75 = vector.shape_cast %74 : vector<8xf32> to vector<8x1xf32>
    %cst_41 = arith.constant 0.000000e+00 : f32
    %76 = vector.shape_cast %75 : vector<8x1xf32> to vector<8x1xf32>
    %77 = vector.broadcast %76 : vector<8x1xf32> to vector<8x8xf32>
    %78 = vector.broadcast %cst_41 : f32 to vector<8x8xf32>
    %79 = arith.select %72, %77, %78 : vector<8x8xi1>, vector<8x8xf32>
    %80 = arith.addf %70, %79 : vector<8x8xf32>
    %c5_i32 = arith.constant 5 : i32
    %81 = vector.broadcast %c5_i32 : i32 to vector<8x8xi32>
    %82 = arith.cmpi eq, %31, %81 : vector<8x8xi32>
    %83 = arith.mulf %30, %30 : vector<8x128xf32>
    %cst_42 = arith.constant dense<0.000000e+00> : vector<8xf32>
    %84 = vector.multi_reduction <add>, %83, %cst_42 [1] : vector<8x128xf32> to vector<8xf32>
    %85 = vector.shape_cast %84 : vector<8xf32> to vector<8x1xf32>
    %cst_43 = arith.constant 0.000000e+00 : f32
    %86 = vector.shape_cast %85 : vector<8x1xf32> to vector<8x1xf32>
    %87 = vector.broadcast %86 : vector<8x1xf32> to vector<8x8xf32>
    %88 = vector.broadcast %cst_43 : f32 to vector<8x8xf32>
    %89 = arith.select %82, %87, %88 : vector<8x8xi1>, vector<8x8xf32>
    %90 = arith.addf %80, %89 : vector<8x8xf32>
    %c0_44 = arith.constant 0 : index
    %c0_45 = arith.constant 0 : index
    %91 = vector.load %arg10[%c0_44, %c0_45] : memref<8x8xf32, #tpu.memory_space<vmem>>, vector<8x8xf32>
    %92 = arith.addf %91, %90 : vector<8x8xf32>
    %c0_46 = arith.constant 0 : index
    %c0_47 = arith.constant 0 : index
    %93 = vector.load %arg10[%c0_46, %c0_47] : memref<8x8xf32, #tpu.memory_space<vmem>>, vector<8x8xf32>
    tpu.vector_store %arg10[%c0_46, %c0_47], %92 {strides = array<i32>} : memref<8x8xf32, #tpu.memory_space<vmem>>, vector<8x8xf32>,
    %c1_i32_48 = arith.constant 1 : i32
    %94 = arith.cmpi eq, %arg2, %c1_i32_48 : i32
    %95 = arith.extui %94 : i1 to i32
    %c0_i32_49 = arith.constant 0 : i32
    %96 = arith.cmpi ne, %95, %c0_i32_49 : i32
    scf.if %96 {
      %c0_50 = arith.constant 0 : index
      %c0_51 = arith.constant 0 : index
      %97 = vector.load %arg10[%c0_50, %c0_51] : memref<8x8xf32, #tpu.memory_space<vmem>>, vector<8x8xf32>
      %c0_52 = arith.constant 0 : index
      %c0_53 = arith.constant 0 : index
      %c0_54 = arith.constant 0 : index
      %c0_55 = arith.constant 0 : index
      %98 = vector.load %arg9[%c0_52, %c0_53, %c0_54, %c0_55] : memref<1x1x8x8xf32, #tpu.memory_space<vmem>>, vector<1x1x8x8xf32>
      %99 = vector.shape_cast %98 : vector<1x1x8x8xf32> to vector<8x8xf32>
      %100 = vector.shape_cast %97 : vector<8x8xf32> to vector<1x1x8x8xf32>
      tpu.vector_store %arg9[%c0_52, %c0_53, %c0_54, %c0_55], %100 {strides = array<i32>} : memref<1x1x8x8xf32, #tpu.memory_space<vmem>>, vector<1x1x8x8xf32>,
    } else {
    }
    return
  }
  func.func @transform_0(%arg0: i32, %arg1: i32, %arg2: i32) -> (i32, i32, i32) {
    %c2_i32 = arith.constant 2 : i32
    %0 = arith.muli %arg1, %c2_i32 : i32
    %1 = arith.addi %0, %arg2 : i32
    %c0_i32 = arith.constant 0 : i32
    %c0_i32_0 = arith.constant 0 : i32
    return %arg0, %c0_i32, %1 : i32, i32, i32
  }
  func.func @transform_1(%arg0: i32, %arg1: i32, %arg2: i32) -> (i32, i32, i32, i32) {
    %c2_i32 = arith.constant 2 : i32
    %0 = arith.muli %arg1, %c2_i32 : i32
    %1 = arith.addi %0, %arg2 : i32
    %c0_i32 = arith.constant 0 : i32
    %c0_i32_0 = arith.constant 0 : i32
    %c0_i32_1 = arith.constant 0 : i32
    return %arg0, %c0_i32, %c0_i32_0, %1 : i32, i32, i32, i32
  }
  func.func @transform_2(%arg0: i32, %arg1: i32, %arg2: i32) -> (i32, i32, i32) {
    %c2_i32 = arith.constant 2 : i32
    %0 = arith.muli %arg1, %c2_i32 : i32
    %1 = arith.addi %0, %arg2 : i32
    %c0_i32 = arith.constant 0 : i32
    %c0_i32_0 = arith.constant 0 : i32
    return %arg0, %c0_i32, %1 : i32, i32, i32
  }
  func.func @transform_3(%arg0: i32, %arg1: i32, %arg2: i32) -> (i32, i32, i32, i32) {
    %c2_i32 = arith.constant 2 : i32
    %0 = arith.muli %arg1, %c2_i32 : i32
    %1 = arith.addi %0, %arg2 : i32
    %c0_i32 = arith.constant 0 : i32
    %c0_i32_0 = arith.constant 0 : i32
    %c0_i32_1 = arith.constant 0 : i32
    return %arg0, %c0_i32, %c0_i32_0, %1 : i32, i32, i32, i32
  }
  func.func @transform_4(%arg0: i32, %arg1: i32, %arg2: i32) -> (i32, i32, i32) {
    %c2_i32 = arith.constant 2 : i32
    %0 = arith.muli %arg1, %c2_i32 : i32
    %1 = arith.addi %0, %arg2 : i32
    %c0_i32 = arith.constant 0 : i32
    %c0_i32_0 = arith.constant 0 : i32
    return %arg0, %c0_i32, %1 : i32, i32, i32
  }
  func.func @transform_5(%arg0: i32, %arg1: i32, %arg2: i32) -> (i32, i32, i32, i32) {
    %c2_i32 = arith.constant 2 : i32
    %0 = arith.muli %arg1, %c2_i32 : i32
    %1 = arith.addi %0, %arg2 : i32
    %c0_i32 = arith.constant 0 : i32
    %c0_i32_0 = arith.constant 0 : i32
    %c0_i32_1 = arith.constant 0 : i32
    return %arg0, %c0_i32, %c0_i32_0, %1 : i32, i32, i32, i32
  }
  func.func @transform_6(%arg0: i32, %arg1: i32, %arg2: i32) -> (i32, i32, i32, i32) {
    %c0_i32 = arith.constant 0 : i32
    %c0_i32_0 = arith.constant 0 : i32
    %c0_i32_1 = arith.constant 0 : i32
    return %arg0, %arg1, %c0_i32, %c0_i32_0 : i32, i32, i32, i32
  }
}

</mosaic_0001>

<llo_original>
// kernel: hrp_loss.1
$region0: #{hrp_loss.1}
  #allocation0 [shape = 'u32[]', space=smem, size = 0x4, offset = 0x4, fixed_abs, tag = 'smem constant byte address 0x4 - core index']
  #allocation1 [shape = 'u32[144,128]{1,0:T(1,128)}', space=vmem, size = 0x12000, scoped, tag = 'internal scratch']
  #allocation2 [shape = 'f32[8,8]{1,0:T(8,128)}', space=vmem, size = 0x1000, scoped, tag = 'scratch operand']
  %s0 = inlined_call_operand.vmem [shape: f32[2,8,256], index: 0, kind: input, shape index: {}]
  %s1 = inlined_call_operand.vmem [shape: f32[2,2,8,256], index: 1, kind: input, shape index: {}]
  %s2 = inlined_call_operand.vmem [shape: f32[2,8,256], index: 2, kind: input, shape index: {}]
  %s3 = inlined_call_operand.vmem [shape: f32[2,2,8,256], index: 3, kind: input, shape index: {}]
  %s4 = inlined_call_operand.vmem [shape: f32[2,8,256], index: 4, kind: input, shape index: {}]
  %s5 = inlined_call_operand.vmem [shape: f32[2,2,8,256], index: 5, kind: input, shape index: {}]
  %s6 = inlined_call_operand.vmem [shape: f32[2,1,8,8], index: 6, kind: output, shape index: {}]
  %s7 = sld [smem:[#allocation0]]
  $region179: #{hrp_loss.1} parent=0
    _
  %s9 = ssub.s32 1, %s7
  %s10 = scalar_select 0, %s9, %s7
  $region1: #{hrp_loss.1} parent=0
    #allocation3 [shape = 'u8[16384]{0}', space=vmem, size = 0x4000, scoped, tag = 'input window, operand 1']
    #allocation4 [shape = 'u8[16384]{0}', space=vmem, size = 0x4000, scoped, tag = 'input window, operand 3']
    #allocation5 [shape = 'u8[16384]{0}', space=vmem, size = 0x4000, scoped, tag = 'input window, operand 5']
    loop: start=0, step=1, limit=6
    $region2: #{hrp_loss.1} parent=1 // loop_pre_header
      _
    $region3: #{hrp_loss.1} parent=1 // loop_header
      %s12 = sphi 0, %s16
      %p13 = scmp.ge.s32.totalorder %s12, 6
      %s19 = sphi 0, %s38
      %s20 = sphi 0, %s34
      %s21 = sphi 0, %s30
      %s22 = sphi 0, %s19
      %s23 = sphi 0, %s20
      %s24 = sphi 0, %s21
      %s25 = sphi 0, %s22
      %s26 = sphi 0, %s23
      %s27 = sphi 0, %s24
      %s47 = sphi 0, %s49
      %s50 = sphi 0, %s47
      %s51 = sphi 0, %s50
      %s67 = sphi 0, %s51
      %s79 = sphi 0, %s81
      %s82 = sphi 0, %s79
      %s83 = sphi 0, %s82
      %s99 = sphi 0, %s83
      %s111 = sphi 0, %s113
      %s114 = sphi 0, %s111
      %s115 = sphi 0, %s114
      %s131 = sphi 0, %s115
      %s143 = sphi 0, %s145
      %s146 = sphi 0, %s143
      %s147 = sphi 0, %s146
      %s163 = sphi 0, %s147
      %s175 = sphi 0, %s177
      %s178 = sphi 0, %s175
      %s179 = sphi 0, %s178
      %s195 = sphi 0, %s179
      %s207 = sphi 0, %s209
      %s210 = sphi 0, %s207
      %s211 = sphi 0, %s210
      %s227 = sphi 0, %s211
      %s235 = sphi 0, %s237
      %s238 = sphi 0, %s235
      %s239 = sphi 0, %s238
      %s255 = sphi 0, %s239
    $region4: #{hrp_loss.1} parent=1 // loop_header_branch
      %15 = sbr.rel (%p13) target = $region8
    $region5: #{hrp_loss.1} parent=1 // loop_body
      %s17 = ssub.s32 %s12, 1
      %s18 = ssub.s32 %s12, 2
      %s28 = sadd.s32 1, %s21
      %p29 = scmp.ge.s32.totalorder %s28, 2
      %s30 = scalar_select %p29, 0, %s28
      %s31 = sadd.s32 1, %s20
      %s32 = scalar_select %p29, %s31, %s20
      %p33 = scmp.ge.s32.totalorder %s32, 1
      %s34 = scalar_select %p33, 0, %s32
      %s35 = sadd.s32 1, %s19
      %s36 = scalar_select %p33, %s35, %s19
      %p37 = scmp.ge.s32.totalorder %s36, 2
      %s38 = scalar_select %p37, 0, %s36
      %s39 = smul.u32 %s20, 2
      %s40 = sadd.s32 %s39, %s21
      %s41 = smul.u32 %s34, 2
      %s42 = sadd.s32 %s41, %s30
      %s43 = ssub.s32 %s19, %s38
      %s44 = ssub.s32 %s40, %s42
      %s45 = sor.u32 %s43, %s44
      %p46 = scmp.eq.s32.totalorder %s45, 0
      %s48 = sadd.s32 %s47, 1
      %s49 = scalar_select %p46, %s47, %s48
      %p52 = pneg %p46
      %p53 = scmp.eq.s32.totalorder %s12, 3
      %p54 = por %p52, %p53
      %p55 = scmp.ne.s32.totalorder %s47, %s50
      %p56 = scmp.eq.s32.totalorder %s12, 0
      %p57 = por %p55, %p56
      %p58 = scmp.ne.s32.totalorder %s47, %s50
      %p59 = scmp.eq.s32.totalorder %s17, 3
      %p60 = por %p58, %p59
      %p61 = scmp.ne.s32.totalorder %s50, %s51
      %p62 = scmp.eq.s32.totalorder %s17, 0
      %p63 = por %p61, %p62
      %p64 = scmp.ne.s32.totalorder %s50, %s51
      %p65 = scmp.eq.s32.totalorder %s18, 3
      %p66 = por %p64, %p65
      %p68 = scmp.ne.s32.totalorder %s51, %s67
      %p69 = scmp.eq.s32.totalorder %s18, 0
      %p70 = por %p68, %p69
      %s71 = smul.u32 %s20, 2
      %s72 = sadd.s32 %s71, %s21
      %s73 = smul.u32 %s34, 2
      %s74 = sadd.s32 %s73, %s30
      %s75 = ssub.s32 %s19, %s38
      %s76 = ssub.s32 %s72, %s74
      %s77 = sor.u32 %s75, %s76
      %p78 = scmp.eq.s32.totalorder %s77, 0
      %s80 = sadd.s32 %s79, 1
      %s81 = scalar_select %p78, %s79, %s80
      %p84 = pneg %p78
      %p85 = scmp.eq.s32.totalorder %s12, 3
      %p86 = por %p84, %p85
      %p87 = scmp.ne.s32.totalorder %s79, %s82
      %p88 = scmp.eq.s32.totalorder %s12, 0
      %p89 = por %p87, %p88
      %p90 = scmp.ne.s32.totalorder %s79, %s82
      %p91 = scmp.eq.s32.totalorder %s17, 3
      %p92 = por %p90, %p91
      %p93 = scmp.ne.s32.totalorder %s82, %s83
      %p94 = scmp.eq.s32.totalorder %s17, 0
      %p95 = por %p93, %p94
      %p96 = scmp.ne.s32.totalorder %s82, %s83
      %p97 = scmp.eq.s32.totalorder %s18, 3
      %p98 = por %p96, %p97
      %p100 = scmp.ne.s32.totalorder %s83, %s99
      %p101 = scmp.eq.s32.totalorder %s18, 0
      %p102 = por %p100, %p101
      %s103 = smul.u32 %s20, 2
      %s104 = sadd.s32 %s103, %s21
      %s105 = smul.u32 %s34, 2
      %s106 = sadd.s32 %s105, %s30
      %s107 = ssub.s32 %s19, %s38
      %s108 = ssub.s32 %s104, %s106
      %s109 = sor.u32 %s107, %s108
      %p110 = scmp.eq.s32.totalorder %s109, 0
      %s112 = sadd.s32 %s111, 1
      %s113 = scalar_select %p110, %s111, %s112
      %p116 = pneg %p110
      %p117 = scmp.eq.s32.totalorder %s12, 3
      %p118 = por %p116, %p117
      %p119 = scmp.ne.s32.totalorder %s111, %s114
      %p120 = scmp.eq.s32.totalorder %s12, 0
      %p121 = por %p119, %p120
      %p122 = scmp.ne.s32.totalorder %s111, %s114
      %p123 = scmp.eq.s32.totalorder %s17, 3
      %p124 = por %p122, %p123
      %p125 = scmp.ne.s32.totalorder %s114, %s115
      %p126 = scmp.eq.s32.totalorder %s17, 0
      %p127 = por %p125, %p126
      %p128 = scmp.ne.s32.totalorder %s114, %s115
      %p129 = scmp.eq.s32.totalorder %s18, 3
      %p130 = por %p128, %p129
      %p132 = scmp.ne.s32.totalorder %s115, %s131
      %p133 = scmp.eq.s32.totalorder %s18, 0
      %p134 = por %p132, %p133
      %s135 = smul.u32 %s20, 2
      %s136 = sadd.s32 %s135, %s21
      %s137 = smul.u32 %s34, 2
      %s138 = sadd.s32 %s137, %s30
      %s139 = ssub.s32 %s19, %s38
      %s140 = ssub.s32 %s136, %s138
      %s141 = sor.u32 %s139, %s140
      %p142 = scmp.eq.s32.totalorder %s141, 0
      %s144 = sadd.s32 %s143, 1
      %s145 = scalar_select %p142, %s143, %s144
      %p148 = pneg %p142
      %p149 = scmp.eq.s32.totalorder %s12, 3
      %p150 = por %p148, %p149
      %p151 = scmp.ne.s32.totalorder %s143, %s146
      %p152 = scmp.eq.s32.totalorder %s12, 0
      %p153 = por %p151, %p152
      %p154 = scmp.ne.s32.totalorder %s143, %s146
      %p155 = scmp.eq.s32.totalorder %s17, 3
      %p156 = por %p154, %p155
      %p157 = scmp.ne.s32.totalorder %s146, %s147
      %p158 = scmp.eq.s32.totalorder %s17, 0
      %p159 = por %p157, %p158
      %p160 = scmp.ne.s32.totalorder %s146, %s147
      %p161 = scmp.eq.s32.totalorder %s18, 3
      %p162 = por %p160, %p161
      %p164 = scmp.ne.s32.totalorder %s147, %s163
      %p165 = scmp.eq.s32.totalorder %s18, 0
      %p166 = por %p164, %p165
      %s167 = smul.u32 %s20, 2
      %s168 = sadd.s32 %s167, %s21
      %s169 = smul.u32 %s34, 2
      %s170 = sadd.s32 %s169, %s30
      %s171 = ssub.s32 %s19, %s38
      %s172 = ssub.s32 %s168, %s170
      %s173 = sor.u32 %s171, %s172
      %p174 = scmp.eq.s32.totalorder %s173, 0
      %s176 = sadd.s32 %s175, 1
      %s177 = scalar_select %p174, %s175, %s176
      %p180 = pneg %p174
      %p181 = scmp.eq.s32.totalorder %s12, 3
      %p182 = por %p180, %p181
      %p183 = scmp.ne.s32.totalorder %s175, %s178
      %p184 = scmp.eq.s32.totalorder %s12, 0
      %p185 = por %p183, %p184
      %p186 = scmp.ne.s32.totalorder %s175, %s178
      %p187 = scmp.eq.s32.totalorder %s17, 3
      %p188 = por %p186, %p187
      %p189 = scmp.ne.s32.totalorder %s178, %s179
      %p190 = scmp.eq.s32.totalorder %s17, 0
      %p191 = por %p189, %p190
      %p192 = scmp.ne.s32.totalorder %s178, %s179
      %p193 = scmp.eq.s32.totalorder %s18, 3
      %p194 = por %p192, %p193
      %p196 = scmp.ne.s32.totalorder %s179, %s195
      %p197 = scmp.eq.s32.totalorder %s18, 0
      %p198 = por %p196, %p197
      %s199 = smul.u32 %s20, 2
      %s200 = sadd.s32 %s199, %s21
      %s201 = smul.u32 %s34, 2
      %s202 = sadd.s32 %s201, %s30
      %s203 = ssub.s32 %s19, %s38
      %s204 = ssub.s32 %s200, %s202
      %s205 = sor.u32 %s203, %s204
      %p206 = scmp.eq.s32.totalorder %s205, 0
      %s208 = sadd.s32 %s207, 1
      %s209 = scalar_select %p206, %s207, %s208
      %p212 = pneg %p206
      %p213 = scmp.eq.s32.totalorder %s12, 3
      %p214 = por %p212, %p213
      %p215 = scmp.ne.s32.totalorder %s207, %s210
      %p216 = scmp.eq.s32.totalorder %s12, 0
      %p217 = por %p215, %p216
      %p218 = scmp.ne.s32.totalorder %s207, %s210
      %p219 = scmp.eq.s32.totalorder %s17, 3
      %p220 = por %p218, %p219
      %p221 = scmp.ne.s32.totalorder %s210, %s211
      %p222 = scmp.eq.s32.totalorder %s17, 0
      %p223 = por %p221, %p222
      %p224 = scmp.ne.s32.totalorder %s210, %s211
      %p225 = scmp.eq.s32.totalorder %s18, 3
      %p226 = por %p224, %p225
      %p228 = scmp.ne.s32.totalorder %s211, %s227
      %p229 = scmp.eq.s32.totalorder %s18, 0
      %p230 = por %p228, %p229
      %s231 = ssub.s32 %s19, %s38
      %s232 = ssub.s32 %s20, %s34
      %s233 = sor.u32 %s231, %s232
      %p234 = scmp.eq.s32.totalorder %s233, 0
      %s236 = sadd.s32 %s235, 1
      %s237 = scalar_select %p234, %s235, %s236
      %p240 = pneg %p234
      %p241 = scmp.eq.s32.totalorder %s12, 3
      %p242 = por %p240, %p241
      %p243 = scmp.ne.s32.totalorder %s235, %s238
      %p244 = scmp.eq.s32.totalorder %s12, 0
      %p245 = por %p243, %p244
      %p246 = scmp.ne.s32.totalorder %s235, %s238
      %p247 = scmp.eq.s32.totalorder %s17, 3
      %p248 = por %p246, %p247
      %p249 = scmp.ne.s32.totalorder %s238, %s239
      %p250 = scmp.eq.s32.totalorder %s17, 0
      %p251 = por %p249, %p250
      %p252 = scmp.ne.s32.totalorder %s238, %s239
      %p253 = scmp.eq.s32.totalorder %s18, 3
      %p254 = por %p252, %p253
      %p256 = scmp.ne.s32.totalorder %s239, %s255
      %p257 = scmp.eq.s32.totalorder %s18, 0
      %p258 = por %p256, %p257
      %p259 = scmp.le.s32.totalorder 1, %s12
      %p260 = scmp.lt.s32.totalorder %s12, 5
      %p261 = pnand %p259, %p260
      %p262 = pneg %p261
      // Predicated region
      $region9: #{hrp_loss.1} parent=5 // pred_check
        _
      $region10: #{hrp_loss.1} parent=5 // pred_check_branch
        %264 = sbr.rel (%p261) target = $region12
      $region11: #{hrp_loss.1} parent=5 // pred_region
        %s265 = ssub.s32 %s12, 1
      $region12: #{hrp_loss.1} parent=5 // pred_fallthru
        _
      %p266 = scmp.lt.s32.totalorder %s12, 4
      // Predicated region
      $region13: #{hrp_loss.1} parent=5 // pred_check
        %p267 = pneg %p266
      $region14: #{hrp_loss.1} parent=5 // pred_check_branch
        %269 = sbr.rel (%p267) target = $region16
      $region15: #{hrp_loss.1} parent=5 // pred_region
        // Predicated region
        $region17: #{hrp_loss.1} parent=15 // pred_check
          %p270 = pneg %p57
        $region18: #{hrp_loss.1} parent=15 // pred_check_branch
          %272 = sbr.rel (%p270) target = $region20
        $region19: #{hrp_loss.1} parent=15 // pred_region
          %s273 = smul.u32 %s20, 2
          %s274 = sadd.s32 %s273, %s21
          %p275 = scmp.lt.s32.totalorder %s19, 1
          %s276 = scalar_select %p275, %s19, 1
          %p277 = scmp.lt.s32.totalorder %s274, 1
          %s278 = scalar_select %p277, %s274, 1
          %s279 = smul.addr %s276, 2
          %s280 = sadd.s32 %s278, %s279
          %s281 = smul.addr %s280, 8
          %s282 = scalar_lea.vmem %s0, %s281
          %s283 = smul.u32 %s20, 2
          %s284 = sadd.s32 %s283, %s21
        $region20: #{hrp_loss.1} parent=15 // pred_fallthru
          _
        // Predicated region
        $region21: #{hrp_loss.1} parent=15 // pred_check
          %p285 = pneg %p89
        $region22: #{hrp_loss.1} parent=15 // pred_check_branch
          %287 = sbr.rel (%p285) target = $region24
        $region23: #{hrp_loss.1} parent=15 // pred_region
          %s288 = sand.u32 %s79, 1
          %s289 = sand.u32 %s79, 1
          %s290 = smul.addr %s289, 16
          %s291 = scalar_lea.vmem [#allocation3], %s290
          %s292 = smul.u32 %s20, 2
          %s293 = sadd.s32 %s292, %s21
          %s294 = smul.addr %s19, 4
          %s295 = sadd.s32 %s293, %s294
          %s296 = smul.addr %s295, 8
          %s297 = scalar_lea.vmem %s1, %s296
          // Predicated region
          $region25: #{hrp_loss.1} parent=23 // pred_check
            _
          $region26: #{hrp_loss.1} parent=23 // pred_check_branch
            %299 = sbr.rel (0) target = $region28
          $region27: #{hrp_loss.1} parent=23 // pred_region
            // Predicated region
            $region29: #{hrp_loss.1} parent=27 // pred_check
              _
            $region30: #{hrp_loss.1} parent=27 // pred_check_branch
              %301 = sbr.rel (0) target = $region32
            $region31: #{hrp_loss.1} parent=27 // pred_region
              // Predicated region
              $region44: #{hrp_loss.1} parent=31 // pred_check
                _
              $region45: #{hrp_loss.1} parent=31 // pred_check_branch
                %319 = sbr.rel (0) target = $region47
              $region46: #{hrp_loss.1} parent=31 // pred_region
                loop: start=0, step=1, limit=1
                $region48: #{hrp_loss.1} parent=46 // loop_pre_header
                  _
                $region49: #{hrp_loss.1} parent=46 // loop_header
                  %s321 = sphi 0, %s325
                  %p322 = scmp.ge.s32.totalorder %s321, 1
                  %s326 = sphi %s297, %s297
                  %s327 = sphi %s291, %s291
                $region50: #{hrp_loss.1} parent=46 // loop_header_branch
                  %324 = sbr.rel (%p322) target = $region54
                $region51: #{hrp_loss.1} parent=46 // loop_body
                  %v328 = vld [vmem:[%s326] sm:$0xff]
                  %329 = vst [vmem:[%s327] sm:$0xff] %v328
                  %v330 = vld [vmem:[%s326 + $0x10] sm:$0xff]
                  %331 = vst [vmem:[%s327 + $0x8] sm:$0xff] %v330
                $region52: #{hrp_loss.1} parent=46 // loop_footer
                  %s325 = sadd.s32 1, %s321
                $region53: #{hrp_loss.1} parent=46 // loop_footer_branch
                  %320 = sbr.rel target = $region49
                $region54: #{hrp_loss.1} parent=46 // loop_exit
                  _
              $region47: #{hrp_loss.1} parent=31 // pred_fallthru
                _
              // Predicated region
              $region55: #{hrp_loss.1} parent=31 // pred_check
                _
              $region56: #{hrp_loss.1} parent=31 // pred_check_branch
                %333 = sbr.rel target = $region58
              $region57: #{hrp_loss.1} parent=31 // pred_region
                _
              $region58: #{hrp_loss.1} parent=31 // pred_fallthru
                _
            $region32: #{hrp_loss.1} parent=27 // pred_fallthru
              _
            // Predicated region
            $region33: #{hrp_loss.1} parent=27 // pred_check
              _
            $region34: #{hrp_loss.1} parent=27 // pred_check_branch
              %303 = sbr.rel target = $region36
            $region35: #{hrp_loss.1} parent=27 // pred_region
              %s305 = ssub.s32 256, 1
              loop: start=0, step=1, limit=1
              $region37: #{hrp_loss.1} parent=35 // loop_pre_header
                _
              $region38: #{hrp_loss.1} parent=35 // loop_header
                %s307 = sphi 0, %s311
                %p308 = scmp.ge.s32.totalorder %s307, 1
                %s312 = sphi %s297, %s297
                %s313 = sphi %s291, %s291
              $region39: #{hrp_loss.1} parent=35 // loop_header_branch
                %310 = sbr.rel (%p308) target = $region43
              $region40: #{hrp_loss.1} parent=35 // loop_body
                %v314 = vld [vmem:[%s312] sm:%s305]
                %315 = vst [vmem:[%s313] sm:%s305] %v314
                %v316 = vld [vmem:[%s312 + $0x10] sm:%s305]
                %317 = vst [vmem:[%s313 + $0x8] sm:%s305] %v316
              $region41: #{hrp_loss.1} parent=35 // loop_footer
                %s311 = sadd.s32 1, %s307
              $region42: #{hrp_loss.1} parent=35 // loop_footer_branch
                %306 = sbr.rel target = $region38
              $region43: #{hrp_loss.1} parent=35 // loop_exit
                _
            $region36: #{hrp_loss.1} parent=27 // pred_fallthru
              _
          $region28: #{hrp_loss.1} parent=23 // pred_fallthru
            _
          %334 = vnop
        $region24: #{hrp_loss.1} parent=15 // pred_fallthru
          _
        // Predicated region
        $region59: #{hrp_loss.1} parent=15 // pred_check
          %p335 = pneg %p121
        $region60: #{hrp_loss.1} parent=15 // pred_check_branch
          %337 = sbr.rel (%p335) target = $region62
        $region61: #{hrp_loss.1} parent=15 // pred_region
          %s338 = smul.u32 %s20, 2
          %s339 = sadd.s32 %s338, %s21
          %p340 = scmp.lt.s32.totalorder %s19, 1
          %s341 = scalar_select %p340, %s19, 1
          %p342 = scmp.lt.s32.totalorder %s339, 1
          %s343 = scalar_select %p342, %s339, 1
          %s344 = smul.addr %s341, 2
          %s345 = sadd.s32 %s343, %s344
          %s346 = smul.addr %s345, 8
          %s347 = scalar_lea.vmem %s2, %s346
          %s348 = smul.u32 %s20, 2
          %s349 = sadd.s32 %s348, %s21
        $region62: #{hrp_loss.1} parent=15 // pred_fallthru
          _
        // Predicated region
        $region63: #{hrp_loss.1} parent=15 // pred_check
          %p350 = pneg %p153
        $region64: #{hrp_loss.1} parent=15 // pred_check_branch
          %352 = sbr.rel (%p350) target = $region66
        $region65: #{hrp_loss.1} parent=15 // pred_region
          %s353 = sand.u32 %s143, 1
          %s354 = sand.u32 %s143, 1
          %s355 = smul.addr %s354, 16
          %s356 = scalar_lea.vmem [#allocation4], %s355
          %s357 = smul.u32 %s20, 2
          %s358 = sadd.s32 %s357, %s21
          %s359 = smul.addr %s19, 4
          %s360 = sadd.s32 %s358, %s359
          %s361 = smul.addr %s360, 8
          %s362 = scalar_lea.vmem %s3, %s361
          // Predicated region
          $region67: #{hrp_loss.1} parent=65 // pred_check
            _
          $region68: #{hrp_loss.1} parent=65 // pred_check_branch
            %364 = sbr.rel (0) target = $region70
          $region69: #{hrp_loss.1} parent=65 // pred_region
            // Predicated region
            $region71: #{hrp_loss.1} parent=69 // pred_check
              _
            $region72: #{hrp_loss.1} parent=69 // pred_check_branch
              %366 = sbr.rel (0) target = $region74
            $region73: #{hrp_loss.1} parent=69 // pred_region
              // Predicated region
              $region86: #{hrp_loss.1} parent=73 // pred_check
                _
              $region87: #{hrp_loss.1} parent=73 // pred_check_branch
                %384 = sbr.rel (0) target = $region89
              $region88: #{hrp_loss.1} parent=73 // pred_region
                loop: start=0, step=1, limit=1
                $region90: #{hrp_loss.1} parent=88 // loop_pre_header
                  _
                $region91: #{hrp_loss.1} parent=88 // loop_header
                  %s386 = sphi 0, %s390
                  %p387 = scmp.ge.s32.totalorder %s386, 1
                  %s391 = sphi %s362, %s362
                  %s392 = sphi %s356, %s356
                $region92: #{hrp_loss.1} parent=88 // loop_header_branch
                  %389 = sbr.rel (%p387) target = $region96
                $region93: #{hrp_loss.1} parent=88 // loop_body
                  %v393 = vld [vmem:[%s391] sm:$0xff]
                  %394 = vst [vmem:[%s392] sm:$0xff] %v393
                  %v395 = vld [vmem:[%s391 + $0x10] sm:$0xff]
                  %396 = vst [vmem:[%s392 + $0x8] sm:$0xff] %v395
                $region94: #{hrp_loss.1} parent=88 // loop_footer
                  %s390 = sadd.s32 1, %s386
                $region95: #{hrp_loss.1} parent=88 // loop_footer_branch
                  %385 = sbr.rel target = $region91
                $region96: #{hrp_loss.1} parent=88 // loop_exit
                  _
              $region89: #{hrp_loss.1} parent=73 // pred_fallthru
                _
              // Predicated region
              $region97: #{hrp_loss.1} parent=73 // pred_check
                _
              $region98: #{hrp_loss.1} parent=73 // pred_check_branch
                %398 = sbr.rel target = $region100
              $region99: #{hrp_loss.1} parent=73 // pred_region
                _
              $region100: #{hrp_loss.1} parent=73 // pred_fallthru
                _
            $region74: #{hrp_loss.1} parent=69 // pred_fallthru
              _
            // Predicated region
            $region75: #{hrp_loss.1} parent=69 // pred_check
              _
            $region76: #{hrp_loss.1} parent=69 // pred_check_branch
              %368 = sbr.rel target = $region78
            $region77: #{hrp_loss.1} parent=69 // pred_region
              %s370 = ssub.s32 256, 1
              loop: start=0, step=1, limit=1
              $region79: #{hrp_loss.1} parent=77 // loop_pre_header
                _
              $region80: #{hrp_loss.1} parent=77 // loop_header
                %s372 = sphi 0, %s376
                %p373 = scmp.ge.s32.totalorder %s372, 1
                %s377 = sphi %s362, %s362
                %s378 = sphi %s356, %s356
              $region81: #{hrp_loss.1} parent=77 // loop_header_branch
                %375 = sbr.rel (%p373) target = $region85
              $region82: #{hrp_loss.1} parent=77 // loop_body
                %v379 = vld [vmem:[%s377] sm:%s370]
                %380 = vst [vmem:[%s378] sm:%s370] %v379
                %v381 = vld [vmem:[%s377 + $0x10] sm:%s370]
                %382 = vst [vmem:[%s378 + $0x8] sm:%s370] %v381
              $region83: #{hrp_loss.1} parent=77 // loop_footer
                %s376 = sadd.s32 1, %s372
              $region84: #{hrp_loss.1} parent=77 // loop_footer_branch
                %371 = sbr.rel target = $region80
              $region85: #{hrp_loss.1} parent=77 // loop_exit
                _
            $region78: #{hrp_loss.1} parent=69 // pred_fallthru
              _
          $region70: #{hrp_loss.1} parent=65 // pred_fallthru
            _
          %399 = vnop
        $region66: #{hrp_loss.1} parent=15 // pred_fallthru
          _
        // Predicated region
        $region101: #{hrp_loss.1} parent=15 // pred_check
          %p400 = pneg %p185
        $region102: #{hrp_loss.1} parent=15 // pred_check_branch
          %402 = sbr.rel (%p400) target = $region104
        $region103: #{hrp_loss.1} parent=15 // pred_region
          %s403 = smul.u32 %s20, 2
          %s404 = sadd.s32 %s403, %s21
          %p405 = scmp.lt.s32.totalorder %s19, 1
          %s406 = scalar_select %p405, %s19, 1
          %p407 = scmp.lt.s32.totalorder %s404, 1
          %s408 = scalar_select %p407, %s404, 1
          %s409 = smul.addr %s406, 2
          %s410 = sadd.s32 %s408, %s409
          %s411 = smul.addr %s410, 8
          %s412 = scalar_lea.vmem %s4, %s411
          %s413 = smul.u32 %s20, 2
          %s414 = sadd.s32 %s413, %s21
        $region104: #{hrp_loss.1} parent=15 // pred_fallthru
          _
        // Predicated region
        $region105: #{hrp_loss.1} parent=15 // pred_check
          %p415 = pneg %p217
        $region106: #{hrp_loss.1} parent=15 // pred_check_branch
          %417 = sbr.rel (%p415) target = $region108
        $region107: #{hrp_loss.1} parent=15 // pred_region
          %s418 = sand.u32 %s207, 1
          %s419 = sand.u32 %s207, 1
          %s420 = smul.addr %s419, 16
          %s421 = scalar_lea.vmem [#allocation5], %s420
          %s422 = smul.u32 %s20, 2
          %s423 = sadd.s32 %s422, %s21
          %s424 = smul.addr %s19, 4
          %s425 = sadd.s32 %s423, %s424
          %s426 = smul.addr %s425, 8
          %s427 = scalar_lea.vmem %s5, %s426
          // Predicated region
          $region109: #{hrp_loss.1} parent=107 // pred_check
            _
          $region110: #{hrp_loss.1} parent=107 // pred_check_branch
            %429 = sbr.rel (0) target = $region112
          $region111: #{hrp_loss.1} parent=107 // pred_region
            // Predicated region
            $region113: #{hrp_loss.1} parent=111 // pred_check
              _
            $region114: #{hrp_loss.1} parent=111 // pred_check_branch
              %431 = sbr.rel (0) target = $region116
            $region115: #{hrp_loss.1} parent=111 // pred_region
              // Predicated region
              $region128: #{hrp_loss.1} parent=115 // pred_check
                _
              $region129: #{hrp_loss.1} parent=115 // pred_check_branch
                %449 = sbr.rel (0) target = $region131
              $region130: #{hrp_loss.1} parent=115 // pred_region
                loop: start=0, step=1, limit=1
                $region132: #{hrp_loss.1} parent=130 // loop_pre_header
                  _
                $region133: #{hrp_loss.1} parent=130 // loop_header
                  %s451 = sphi 0, %s455
                  %p452 = scmp.ge.s32.totalorder %s451, 1
                  %s456 = sphi %s427, %s427
                  %s457 = sphi %s421, %s421
                $region134: #{hrp_loss.1} parent=130 // loop_header_branch
                  %454 = sbr.rel (%p452) target = $region138
                $region135: #{hrp_loss.1} parent=130 // loop_body
                  %v458 = vld [vmem:[%s456] sm:$0xff]
                  %459 = vst [vmem:[%s457] sm:$0xff] %v458
                  %v460 = vld [vmem:[%s456 + $0x10] sm:$0xff]
                  %461 = vst [vmem:[%s457 + $0x8] sm:$0xff] %v460
                $region136: #{hrp_loss.1} parent=130 // loop_footer
                  %s455 = sadd.s32 1, %s451
                $region137: #{hrp_loss.1} parent=130 // loop_footer_branch
                  %450 = sbr.rel target = $region133
                $region138: #{hrp_loss.1} parent=130 // loop_exit
                  _
              $region131: #{hrp_loss.1} parent=115 // pred_fallthru
                _
              // Predicated region
              $region139: #{hrp_loss.1} parent=115 // pred_check
                _
              $region140: #{hrp_loss.1} parent=115 // pred_check_branch
                %463 = sbr.rel target = $region142
              $region141: #{hrp_loss.1} parent=115 // pred_region
                _
              $region142: #{hrp_loss.1} parent=115 // pred_fallthru
                _
            $region116: #{hrp_loss.1} parent=111 // pred_fallthru
              _
            // Predicated region
            $region117: #{hrp_loss.1} parent=111 // pred_check
              _
            $region118: #{hrp_loss.1} parent=111 // pred_check_branch
              %433 = sbr.rel target = $region120
            $region119: #{hrp_loss.1} parent=111 // pred_region
              %s435 = ssub.s32 256, 1
              loop: start=0, step=1, limit=1
              $region121: #{hrp_loss.1} parent=119 // loop_pre_header
                _
              $region122: #{hrp_loss.1} parent=119 // loop_header
                %s437 = sphi 0, %s441
                %p438 = scmp.ge.s32.totalorder %s437, 1
                %s442 = sphi %s427, %s427
                %s443 = sphi %s421, %s421
              $region123: #{hrp_loss.1} parent=119 // loop_header_branch
                %440 = sbr.rel (%p438) target = $region127
              $region124: #{hrp_loss.1} parent=119 // loop_body
                %v444 = vld [vmem:[%s442] sm:%s435]
                %445 = vst [vmem:[%s443] sm:%s435] %v444
                %v446 = vld [vmem:[%s442 + $0x10] sm:%s435]
                %447 = vst [vmem:[%s443 + $0x8] sm:%s435] %v446
              $region125: #{hrp_loss.1} parent=119 // loop_footer
                %s441 = sadd.s32 1, %s437
              $region126: #{hrp_loss.1} parent=119 // loop_footer_branch
                %436 = sbr.rel target = $region122
              $region127: #{hrp_loss.1} parent=119 // loop_exit
                _
            $region120: #{hrp_loss.1} parent=111 // pred_fallthru
              _
          $region112: #{hrp_loss.1} parent=107 // pred_fallthru
            _
          %464 = vnop
        $region108: #{hrp_loss.1} parent=15 // pred_fallthru
          _
      $region16: #{hrp_loss.1} parent=5 // pred_fallthru
        _
      %p465 = scmp.le.s32.totalorder 1, %s12
      %p466 = scmp.lt.s32.totalorder %s12, 5
      %p467 = pnand %p465, %p466
      %p468 = pneg %p467
      // Predicated region
      $region143: #{hrp_loss.1} parent=5 // pred_check
        _
      $region144: #{hrp_loss.1} parent=5 // pred_check_branch
        %470 = sbr.rel (%p467) target = $region146
      $region145: #{hrp_loss.1} parent=5 // pred_region
        %s471 = ssub.s32 %s12, 1
        %s472 = sand.u32 %s82, 1
        %s473 = sand.u32 %s82, 1
        %s474 = smul.addr %s473, 16
        %s475 = scalar_lea.vmem [#allocation3], %s474
        // Predicated region
        $region147: #{hrp_loss.1} parent=145 // pred_check
          %p476 = pneg %p95
        $region148: #{hrp_loss.1} parent=145 // pred_check_branch
          %478 = sbr.rel (%p476) target = $region150
        $region149: #{hrp_loss.1} parent=145 // pred_region
          _
        $region150: #{hrp_loss.1} parent=145 // pred_fallthru
          _
        %s479 = sand.u32 %s146, 1
        %s480 = sand.u32 %s146, 1
        %s481 = smul.addr %s480, 16
        %s482 = scalar_lea.vmem [#allocation4], %s481
        // Predicated region
        $region151: #{hrp_loss.1} parent=145 // pred_check
          %p483 = pneg %p159
        $region152: #{hrp_loss.1} parent=145 // pred_check_branch
          %485 = sbr.rel (%p483) target = $region154
        $region153: #{hrp_loss.1} parent=145 // pred_region
          _
        $region154: #{hrp_loss.1} parent=145 // pred_fallthru
          _
        %s486 = sand.u32 %s210, 1
        %s487 = sand.u32 %s210, 1
        %s488 = smul.addr %s487, 16
        %s489 = scalar_lea.vmem [#allocation5], %s488
        // Predicated region
        $region155: #{hrp_loss.1} parent=145 // pred_check
          %p490 = pneg %p223
        $region156: #{hrp_loss.1} parent=145 // pred_check_branch
          %492 = sbr.rel (%p490) target = $region158
        $region157: #{hrp_loss.1} parent=145 // pred_region
          _
        $region158: #{hrp_loss.1} parent=145 // pred_fallthru
          _
        %s493 = smul.u32 %s23, 2
        %s494 = sadd.s32 %s493, %s24
        %p495 = scmp.lt.s32.totalorder %s22, 1
        %s496 = scalar_select %p495, %s22, 1
        %p497 = scmp.lt.s32.totalorder %s494, 1
        %s498 = scalar_select %p497, %s494, 1
        %s499 = smul.addr %s496, 2
        %s500 = sadd.s32 %s498, %s499
        %s501 = smul.addr %s500, 8
        %s502 = scalar_lea.vmem %s0, %s501
        %p503 = pneg %p63
        %p504 = pneg %p60
        %s505 = sand.u32 %s82, 1
        %s506 = sand.u32 %s82, 1
        %s507 = smul.addr %s506, 16
        %s508 = scalar_lea.vmem [#allocation3], %s507
        %p509 = pneg %p95
        %p510 = pneg %p92
        %s511 = smul.u32 %s23, 2
        %s512 = sadd.s32 %s511, %s24
        %p513 = scmp.lt.s32.totalorder %s22, 1
        %s514 = scalar_select %p513, %s22, 1
        %p515 = scmp.lt.s32.totalorder %s512, 1
        %s516 = scalar_select %p515, %s512, 1
        %s517 = smul.addr %s514, 2
        %s518 = sadd.s32 %s516, %s517
        %s519 = smul.addr %s518, 8
        %s520 = scalar_lea.vmem %s2, %s519
        %p521 = pneg %p127
        %p522 = pneg %p124
        %s523 = sand.u32 %s146, 1
        %s524 = sand.u32 %s146, 1
        %s525 = smul.addr %s524, 16
        %s526 = scalar_lea.vmem [#allocation4], %s525
        %p527 = pneg %p159
        %p528 = pneg %p156
        %s529 = smul.u32 %s23, 2
        %s530 = sadd.s32 %s529, %s24
        %p531 = scmp.lt.s32.totalorder %s22, 1
        %s532 = scalar_select %p531, %s22, 1
        %p533 = scmp.lt.s32.totalorder %s530, 1
        %s534 = scalar_select %p533, %s530, 1
        %s535 = smul.addr %s532, 2
        %s536 = sadd.s32 %s534, %s535
        %s537 = smul.addr %s536, 8
        %s538 = scalar_lea.vmem %s4, %s537
        %p539 = pneg %p191
        %p540 = pneg %p188
        %s541 = sand.u32 %s210, 1
        %s542 = sand.u32 %s210, 1
        %s543 = smul.addr %s542, 16
        %s544 = scalar_lea.vmem [#allocation5], %s543
        %p545 = pneg %p223
        %p546 = pneg %p220
        %p547 = pneg %p251
        %p548 = pneg %p248
        %p549 = scmp.lt.s32.totalorder %s22, 1
        %s550 = scalar_select %p549, %s22, 1
        %p551 = scmp.lt.s32.totalorder %s23, 0
        %s552 = scalar_select %p551, %s23, 0
        %s553 = sadd.s32 %s552, %s550
        %s554 = smul.addr %s553, 8
        %s555 = scalar_lea.vmem %s6, %s554
        %s556 = smul.u32 %s23, 2
        %s557 = sadd.s32 %s556, %s24
        %p558 = scmp.lt.s32.totalorder %s22, 1
        %s559 = scalar_select %p558, %s22, 1
        %p560 = scmp.lt.s32.totalorder %s557, 1
        %s561 = scalar_select %p560, %s557, 1
        %s562 = smul.addr %s559, 2
        %s563 = sadd.s32 %s561, %s562
        %s564 = smul.addr %s563, 8
        %s565 = scalar_lea.vmem %s0, %s564
        %s566 = smul.u32 %s23, 2
        %s567 = sadd.s32 %s566, %s24
        %s568 = smul.u32 %s23, 2
        %s569 = sadd.s32 %s568, %s24
        %s570 = smul.u32 %s23, 2
        %s571 = sadd.s32 %s570, %s24
        %p572 = scmp.lt.s32.totalorder %s22, 1
        %s573 = scalar_select %p572, %s22, 1
        %p574 = scmp.lt.s32.totalorder %s571, 1
        %s575 = scalar_select %p574, %s571, 1
        %s576 = smul.addr %s573, 2
        %s577 = sadd.s32 %s575, %s576
        %s578 = smul.addr %s577, 8
        %s579 = scalar_lea.vmem %s2, %s578
        %s580 = smul.u32 %s23, 2
        %s581 = sadd.s32 %s580, %s24
        %s582 = smul.u32 %s23, 2
        %s583 = sadd.s32 %s582, %s24
        %s584 = smul.u32 %s23, 2
        %s585 = sadd.s32 %s584, %s24
        %p586 = scmp.lt.s32.totalorder %s22, 1
        %s587 = scalar_select %p586, %s22, 1
        %p588 = scmp.lt.s32.totalorder %s585, 1
        %s589 = scalar_select %p588, %s585, 1
        %s590 = smul.addr %s587, 2
        %s591 = sadd.s32 %s589, %s590
        %s592 = smul.addr %s591, 8
        %s593 = scalar_lea.vmem %s4, %s592
        %s594 = smul.u32 %s23, 2
        %s595 = sadd.s32 %s594, %s24
        %s596 = smul.u32 %s23, 2
        %s597 = sadd.s32 %s596, %s24
        %p598 = scmp.lt.s32.totalorder %s22, 1
        %s599 = scalar_select %p598, %s22, 1
        %p600 = scmp.lt.s32.totalorder %s23, 0
        %s601 = scalar_select %p600, %s23, 0
        %s602 = sadd.s32 %s601, %s599
        %s603 = smul.addr %s602, 8
        %s604 = scalar_lea.vmem %s6, %s603
        %p605 = scmp.eq.s32.totalorder %s24, 0
        // Predicated region
        $region159: #{hrp_loss.1} parent=145 // pred_check
          %p606 = pneg %p605
        $region160: #{hrp_loss.1} parent=145 // pred_check_branch
          %608 = sbr.rel (%p606) target = $region162
        $region161: #{hrp_loss.1} parent=145 // pred_region
          %vm609 = vcmask 64512
          %610 = vst.msk [vmem:[#allocation2] sm:$0xff] %vm609, 0.0
        $region162: #{hrp_loss.1} parent=145 // pred_fallthru
          _
        %v611 = vld [vmem:[%s593] sm:$0xff]
        %v612 = vld [vmem:[%s489] sm:$0xff]
        %s613 = scalar_lea.vmem %s489, 8 [#allocation5]
        %v614 = vld [vmem:[%s613] sm:$0xff]
        %v615 = vld [vmem:[%s565] sm:$0xff]
        %v616 = vsub.f32 %v615, %v611
        %v617 = vld [vmem:[%s475] sm:$0xff]
        %v618 = vmul.f32 %v617, %v611
        %v619 = vsub.f32 %v618, %v612
        %s620 = scalar_lea.vmem %s475, 8 [#allocation3]
        %v621 = vld [vmem:[%s620] sm:$0xff]
        %v622 = vmul.f32 %v621, %v611
        %v623 = vsub.f32 %v622, %v614
        %v624 = vld [vmem:[%s579] sm:$0xff]
        %v625 = vsub.f32 %v624, %v611
        %v626 = vld [vmem:[%s482] sm:$0xff]
        %v627 = vsub.f32 %v626, %v612
        %v628 = vmul.f32 %v627, %v611
        %s629 = scalar_lea.vmem %s482, 8 [#allocation4]
        %v630 = vld [vmem:[%s629] sm:$0xff]
        %v631 = vsub.f32 %v630, %v614
        %v632 = vmul.f32 %v631, %v611
        %v633 = vlaneseq
        %v634 = vand.u32 %v633, 127
        %vm635 = vcmp.eq.s32.totalorder %v634, 0
        %v636 = vmul.f32 %v616, %v616
        %637 = vadd.xlane.f32.xlu0 %v636
        %v638 = vpop.xlane.xlu0 %637
        %v639 = vsel %vm635, %v638, 0.0
        %vm640 = vcmp.eq.s32.totalorder %v634, 1
        %v641 = vmul.f32 %v619, %v619
        %642 = vadd.xlane.f32.xlu0 %v641
        %v643 = vpop.xlane.xlu0 %642
        %v644 = vsel %vm640, %v643, 0.0
        %v645 = vadd.f32 %v639, %v644
        %vm646 = vcmp.eq.s32.totalorder %v634, 2
        %v647 = vmul.f32 %v623, %v623
        %648 = vadd.xlane.f32.xlu0 %v647
        %v649 = vpop.xlane.xlu0 %648
        %v650 = vsel %vm646, %v649, 0.0
        %v651 = vadd.f32 %v645, %v650
        %vm652 = vcmp.eq.s32.totalorder %v634, 3
        %v653 = vmul.f32 %v625, %v625
        %654 = vadd.xlane.f32.xlu0 %v653
        %v655 = vpop.xlane.xlu0 %654
        %v656 = vsel %vm652, %v655, 0.0
        %v657 = vadd.f32 %v651, %v656
        %vm658 = vcmp.eq.s32.totalorder %v634, 4
        %v659 = vmul.f32 %v628, %v628
        %660 = vadd.xlane.f32.xlu0 %v659
        %v661 = vpop.xlane.xlu0 %660
        %v662 = vsel %vm658, %v661, 0.0
        %v663 = vadd.f32 %v657, %v662
        %vm664 = vcmp.eq.s32.totalorder %v634, 5
        %v665 = vmul.f32 %v632, %v632
        %666 = vadd.xlane.f32.xlu0 %v665
        %v667 = vpop.xlane.xlu0 %666
        %v668 = vsel %vm664, %v667, 0.0
        %v669 = vadd.f32 %v663, %v668
        %v670 = vld [vmem:[#allocation2] sm:$0xff]
        %v671 = vadd.f32 %v670, %v669
        %vm672 = vcmask 64512
        %673 = vst.msk [vmem:[#allocation2] sm:$0xff] %vm672, %v671
        %p674 = scmp.eq.s32.totalorder %s24, 1
        // Predicated region
        $region163: #{hrp_loss.1} parent=145 // pred_check
          %p675 = pneg %p674
        $region164: #{hrp_loss.1} parent=145 // pred_check_branch
          %677 = sbr.rel (%p675) target = $region166
        $region165: #{hrp_loss.1} parent=145 // pred_region
          %v678 = vld [vmem:[#allocation2] sm:$0xff]
          %679 = vst.msk [vmem:[%s604] sm:$0xff] %vm672, %v678
        $region166: #{hrp_loss.1} parent=145 // pred_fallthru
          _
        %p680 = scmp.lt.s32.totalorder %s22, 1
        %s681 = scalar_select %p680, %s22, 1
        %p682 = scmp.lt.s32.totalorder %s23, 0
        %s683 = scalar_select %p682, %s23, 0
        %s684 = sadd.s32 %s683, %s681
        %s685 = smul.addr %s684, 8
        %s686 = scalar_lea.vmem %s6, %s685
        // Predicated region
        $region167: #{hrp_loss.1} parent=145 // pred_check
          %p687 = pneg %p248
        $region168: #{hrp_loss.1} parent=145 // pred_check_branch
          %689 = sbr.rel (%p687) target = $region170
        $region169: #{hrp_loss.1} parent=145 // pred_region
          _
        $region170: #{hrp_loss.1} parent=145 // pred_fallthru
          _
      $region146: #{hrp_loss.1} parent=5 // pred_fallthru
        _
      %p690 = scmp.le.s32.totalorder 2, %s12
      // Predicated region
      $region171: #{hrp_loss.1} parent=5 // pred_check
        %p691 = pneg %p690
      $region172: #{hrp_loss.1} parent=5 // pred_check_branch
        %693 = sbr.rel (%p691) target = $region174
      $region173: #{hrp_loss.1} parent=5 // pred_region
        %s694 = ssub.s32 %s12, 2
        // Predicated region
        $region175: #{hrp_loss.1} parent=173 // pred_check
          %p695 = pneg %p254
        $region176: #{hrp_loss.1} parent=173 // pred_check_branch
          %697 = sbr.rel (%p695) target = $region178
        $region177: #{hrp_loss.1} parent=173 // pred_region
          %p698 = scmp.lt.s32.totalorder %s25, 1
          %s699 = scalar_select %p698, %s25, 1
          %p700 = scmp.lt.s32.totalorder %s26, 0
          %s701 = scalar_select %p700, %s26, 0
          %s702 = sadd.s32 %s701, %s699
          %s703 = smul.addr %s702, 8
          %s704 = scalar_lea.vmem %s6, %s703
        $region178: #{hrp_loss.1} parent=173 // pred_fallthru
          _
      $region174: #{hrp_loss.1} parent=5 // pred_fallthru
        _
    $region6: #{hrp_loss.1} parent=1 // loop_footer
      %s16 = sadd.s32 1, %s12
    $region7: #{hrp_loss.1} parent=1 // loop_footer_branch
      %11 = sbr.rel target = $region3
    $region8: #{hrp_loss.1} parent=1 // loop_exit
      _

</llo_original>
